<compile_context>
chip_gen: v7x
topology: tpu7x:2x2x1
jax: 0.10.0
libtpu: 0.0.40
codegen_flags: <defaults>
</compile_context>

<pallas_src>
import functools

import jax
import jax.numpy as jnp
from jax.experimental import pallas as pl
from jax.experimental.pallas import tpu as pltpu

TEMPERATURE = 0.1
INV_SQRT_TEMP = (1.0 / TEMPERATURE) ** 0.5   # fold /T into the normalize scale
SIM_SHIFT = 1.0 / TEMPERATURE                # static bound on |sim| after fold


# --------------------------------------------------------------------------- #
# Kernel 1: L2 normalize rows (+ fold 1/sqrt(T)), emit bf16 MXU operands
# --------------------------------------------------------------------------- #
def _normalize_kernel(emb_ref, out_ref):
    e = emb_ref[...]                                         # [TBR, Dp] f32
    sq = jnp.sum(e * e, axis=1, keepdims=True)               # [TBR, 1]
    # F.normalize eps=1e-12 on the norm == 1e-24 on the squared norm.
    inv = jax.lax.rsqrt(jnp.maximum(sq, 1e-24)) * INV_SQRT_TEMP
    out_ref[...] = (e * inv).astype(out_ref.dtype)           # bf16 out


# --------------------------------------------------------------------------- #
# Kernel 2: tiled similarity + streaming fixed-shift logsumexp over negatives
# --------------------------------------------------------------------------- #
def _npair_tile_kernel(emb_r_ref, emb_c_ref, lab_r_ref, lab_c_ref, ch_ref,
                       loss_ref, valid_ref, s_ref, num_ref,
                       *, b_real, b_padded, block_kb, num_col_tiles):
    j = pl.program_id(1)

    @pl.when(j == 0)
    def _init():
        s_ref[...] = jnp.zeros_like(s_ref)
        num_ref[...] = jnp.zeros_like(num_ref)

    # Column tile sliced out of the VMEM-resident (bp, dp) operand.
    if num_col_tiles == 1:
        e_c = emb_c_ref[...]
    else:
        col_start = pl.multiple_of(j * block_kb, block_kb)
        e_c = emb_c_ref[pl.ds(col_start, block_kb), :]       # [TBK, Dp] bf16

    # [TBR, TBK] similarity tile; contract on D for both operands (q @ k.T),
    # bf16 operands with f32 MXU accumulation.
    sim = jax.lax.dot_general(
        emb_r_ref[...], e_c,
        dimension_numbers=(((1,), (1,)), ((), ())),
        preferred_element_type=jnp.float32)

    col = j * block_kb + jax.lax.broadcasted_iota(jnp.int32, sim.shape, 1)

    # negatives: different label (diagonal is same-label, so auto-excluded)
    neg = lab_c_ref[...] != lab_r_ref[...]                   # [TBR, TBK]
    if b_padded != b_real:                                   # static guard
        neg = jnp.logical_and(neg, col < b_real)             # drop padded cols

    # numerator contribution: sim at the chosen positive column of each row.
    num_ref[...] += jnp.sum(jnp.where(col == ch_ref[...], sim, 0.0),
                            axis=1, keepdims=True)

    # |sim| <= 1/T for unit-norm rows, so a fixed shift replaces the online
    # max recurrence; exp(sim - 1/T) >= exp(-2/T) never underflows in f32.
    p = jnp.where(neg, jnp.exp(sim - SIM_SHIFT), 0.0)
    s_ref[...] += jnp.sum(p, axis=1, keepdims=True)

    @pl.when(j == pl.num_programs(1) - 1)
    def _finalize():
        s = s_ref[...]
        has_neg = s > 0.0
        valid = jnp.logical_and(ch_ref[...] >= 0, has_neg)
        lse = SIM_SHIFT + jnp.log(jnp.where(has_neg, s, 1.0))
        loss_ref[...] = jnp.where(valid, lse - num_ref[...], 0.0)   # -(num-lse)
        valid_ref[...] = valid.astype(jnp.float32)


# --------------------------------------------------------------------------- #
# Wrapper helpers
# --------------------------------------------------------------------------- #
def _round_up(x, m):
    return ((x + m - 1) // m) * m


def _pick_tiles(b):
    """Row tile, column tile, padded batch."""
    tbr = min(_round_up(b, 8), 128)
    bp = _round_up(b, tbr)
    tbk = tbr
    for t in (512, 384, 256):           # widest column tile dividing bp
        if t <= bp and bp % t == 0:     # (feeds the 256-wide MXU on v6e/v7x)
            tbk = t
            break
    return tbr, tbk, bp


def _choose_positive_indices(labels, key):
    """Uniformly pick one same-label index (!= self) per row; -1 if none.

    O(B log B): argsort groups rows by label, a segment count gives the group
    size, and the r-th *other* member of the group is gathered back.  No BxB
    arrays are materialized (the previous wrapper built several).
    """
    b = labels.shape[0]
    idx = jnp.arange(b, dtype=jnp.int32)
    order = jnp.argsort(labels).astype(jnp.int32)             # group by label
    sorted_lab = labels[order]
    pos_in_sorted = jnp.zeros((b,), jnp.int32).at[order].set(idx)
    is_start = jnp.concatenate(
        [jnp.array([True]), sorted_lab[1:] != sorted_lab[:-1]])
    start_sorted = jax.lax.cummax(jnp.where(is_start, idx, 0), axis=0)
    group_id = jnp.cumsum(is_start.astype(jnp.int32)) - 1
    size_sorted = jax.ops.segment_sum(
        jnp.ones((b,), jnp.int32), group_id, num_segments=b)[group_id]

    p = pos_in_sorted                       # self position in the sorted array
    start = start_sorted[p]
    rank = p - start                        # self rank within its label group
    n_pos = size_sorted[p] - 1              # same-label rows excluding self

    # TODO(synk): torch draws its positive with torch.randint; this is the
    # same uniform distribution over positives but not bit-identical RNG.
    u = jax.random.uniform(key, (b,))
    r = jnp.minimum((u * n_pos.astype(jnp.float32)).astype(jnp.int32),
                    jnp.maximum(n_pos - 1, 0))
    t = jnp.where(r >= rank, r + 1, r)      # skip self
    chosen = order[jnp.clip(start + t, 0, b - 1)]
    return jnp.where(n_pos > 0, chosen, jnp.int32(-1))


# --------------------------------------------------------------------------- #
# Wrapper
# --------------------------------------------------------------------------- #
def npair_loss_pallas(embeddings, labels, key):
    """embeddings: [B, D] f32, labels: [B] int -> (scalar f32 loss, chosen)."""
    B, D = embeddings.shape
    embeddings = embeddings.astype(jnp.float32)
    labels = labels.astype(jnp.int32)

    chosen = _choose_positive_indices(labels, key)

    tbr, tbk, bp = _pick_tiles(B)
    dp = _round_up(D, 128)
    n_row_tiles = bp // tbr
    n_col_tiles = bp // tbk

    emb_p = jnp.zeros((bp, dp), jnp.float32).at[:B, :D].set(embeddings)
    lab_p = jnp.full((bp,), -1, jnp.int32).at[:B].set(labels)
    ch_p = jnp.full((bp,), -1, jnp.int32).at[:B].set(chosen)

    # ---- kernel 1: normalize, fold 1/sqrt(T), emit bf16 MXU operands ----
    # TODO(synk): could be fused into kernel 2 (normalize the resident column
    # block on the first grid step) to drop this launch + HBM round trip.
    e_norm = pl.pallas_call(
        _normalize_kernel,
        out_shape=jax.ShapeDtypeStruct((bp, dp), jnp.bfloat16),
        grid=(n_row_tiles,),
        in_specs=[pl.BlockSpec((tbr, dp), lambda i: (i, 0))],
        out_specs=pl.BlockSpec((tbr, dp), lambda i: (i, 0)),
        compiler_params=pltpu.CompilerParams(
            dimension_semantics=("parallel",)),
    )(emb_p)

    # VMEM budget: resident bf16 column operand (x2 for pipeline buffers)
    # plus small tiles/intermediates; sized against v7x's 64 MiB physical.
    resident_bytes = bp * dp * 2
    vmem_limit = int(min(64 << 20, max(32 << 20, 2 * resident_bytes + (8 << 20))))

    kernel = functools.partial(_npair_tile_kernel, b_real=B, b_padded=bp,
                               block_kb=tbk, num_col_tiles=n_col_tiles)
    per_row, valid = pl.pallas_call(
        kernel,
        out_shape=(jax.ShapeDtypeStruct((bp, 1), jnp.float32),
                   jax.ShapeDtypeStruct((bp, 1), jnp.float32)),
        grid_spec=pltpu.PrefetchScalarGridSpec(
            num_scalar_prefetch=0,
            grid=(n_row_tiles, n_col_tiles),
            in_specs=[
                pl.BlockSpec((tbr, dp), lambda i, j: (i, 0)),   # query rows
                pl.BlockSpec((bp, dp), lambda i, j: (0, 0)),    # resident cols
                pl.BlockSpec((tbr, 1), lambda i, j: (i, 0)),    # row labels
                pl.BlockSpec((1, tbk), lambda i, j: (0, j)),    # col labels
                pl.BlockSpec((tbr, 1), lambda i, j: (i, 0)),    # chosen pos idx
            ],
            out_specs=[
                pl.BlockSpec((tbr, 1), lambda i, j: (i, 0)),
                pl.BlockSpec((tbr, 1), lambda i, j: (i, 0)),
            ],
            scratch_shapes=[pltpu.VMEM((tbr, 1), jnp.float32)] * 2),
        compiler_params=pltpu.CompilerParams(
            dimension_semantics=("parallel", "arbitrary"),
            vmem_limit_bytes=vmem_limit),
    )(e_norm, e_norm,
      lab_p.reshape(bp, 1), lab_p.reshape(1, bp), ch_p.reshape(bp, 1))

    total = jnp.sum(per_row)
    n_valid = jnp.sum(valid)
    loss = jnp.where(n_valid > 0.0, total / n_valid, 0.0)
    return loss, chosen


# --------------------------------------------------------------------------- #
# Pure-JAX reference (mirrors the kernel's bf16 MXU operands, f32 accumulate)
# --------------------------------------------------------------------------- #
def npair_loss_ref(embeddings, labels, chosen):
    B = embeddings.shape[0]
    sq = jnp.sum(embeddings * embeddings, axis=1, keepdims=True)
    e = embeddings * (jax.lax.rsqrt(jnp.maximum(sq, 1e-24)) * INV_SQRT_TEMP)
    e = e.astype(jnp.bfloat16)
    sim = jax.lax.dot_general(e, e, (((1,), (1,)), ((), ())),
                              preferred_element_type=jnp.float32)
    same = labels[:, None] == labels[None, :]
    neg_mask = ~same
    has_neg = neg_mask.any(axis=1)
    valid = (chosen >= 0) & has_neg
    numerator = sim[jnp.arange(B), jnp.clip(chosen, 0, B - 1)]
    lse = jax.scipy.special.logsumexp(
        jnp.where(neg_mask, sim, -jnp.inf), axis=1)
    per_row = jnp.where(valid, -(numerator - lse), 0.0)
    n_valid = jnp.sum(valid.astype(jnp.float32))
    return jnp.where(n_valid > 0, jnp.sum(per_row) / n_valid, 0.0)


if __name__ == "__main__":
    root = jax.random.PRNGKey(0)

    # Small case with row/column/feature padding (B=12 -> 16, D=20 -> 128).
    k_emb, k_lab, k_sel = jax.random.split(jax.random.fold_in(root, 1), 3)
    B, D = 12, 20
    emb = jax.random.normal(k_emb, (B, D), dtype=jnp.float32)
    lab = jax.random.randint(k_lab, (B,), 0, 3, dtype=jnp.int32)
    loss, chosen = npair_loss_pallas(emb, lab, k_sel)
    loss = jax.block_until_ready(loss)
    ref = npair_loss_ref(emb, lab, chosen)
    assert jnp.allclose(loss, ref, atol=1e-2, rtol=1e-2), (loss, ref)
    ok = jnp.where(chosen >= 0,
                   (lab[jnp.clip(chosen, 0, B - 1)] == lab)
                   & (chosen != jnp.arange(B)),
                   True)
    assert bool(jnp.all(ok)), "chosen positive is not a same-label non-self index"

    # Multi-tile case: 5x5 grid of (128,128) tiles, streaming accumulation over
    # column tiles plus padded rows/columns (600 -> 640).
    k_emb2, k_lab2, k_sel2 = jax.random.split(jax.random.fold_in(root, 2), 3)
    B2, D2 = 600, 48
    emb2 = jax.random.normal(k_emb2, (B2, D2), dtype=jnp.float32)
    lab2 = jax.random.randint(k_lab2, (B2,), 0, 8, dtype=jnp.int32)
    loss2, chosen2 = npair_loss_pallas(emb2, lab2, k_sel2)
    loss2 = jax.block_until_ready(loss2)
    ref2 = npair_loss_ref(emb2, lab2, chosen2)
    assert jnp.allclose(loss2, ref2, atol=1e-2, rtol=1e-2), (loss2, ref2)
    ok2 = jnp.where(chosen2 >= 0,
                    (lab2[jnp.clip(chosen2, 0, B2 - 1)] == lab2)
                    & (chosen2 != jnp.arange(B2)),
                    True)
    assert bool(jnp.all(ok2)), "chosen positive is not a same-label non-self index"

    print("KERNEL_OK")
</pallas_src>

<mosaic_0001>
module attributes {stable_mosaic.version = 11 : i64} {
  func.func @_normalize_kernel(%arg0: i32, %arg1: memref<16x128xf32, #tpu.memory_space<vmem>>, %arg2: memref<16x128xbf16, #tpu.memory_space<vmem>>) attributes {dimension_semantics = [#tpu.dimension_semantics<parallel>], iteration_bounds = array<i64: 1>, scalar_prefetch = 0 : i64, scratch_operands = 0 : i64, tpu.core_type = #tpu.core_type<tc>, window_params = [{transform_indices = @transform_0, window_bounds = array<i64: 16, 128>}, {transform_indices = @transform_1, window_bounds = array<i64: 16, 128>}]} {
    %c0 = arith.constant 0 : index
    %c0_0 = arith.constant 0 : index
    %0 = vector.load %arg1[%c0, %c0_0] : memref<16x128xf32, #tpu.memory_space<vmem>>, vector<16x128xf32>
    %1 = arith.mulf %0, %0 : vector<16x128xf32>
    %cst = arith.constant dense<0.000000e+00> : vector<16xf32>
    %2 = vector.multi_reduction <add>, %1, %cst [1] : vector<16x128xf32> to vector<16xf32>
    %3 = vector.shape_cast %2 : vector<16xf32> to vector<16x1xf32>
    %cst_1 = arith.constant 1.000000e-24 : f32
    %4 = vector.broadcast %cst_1 : f32 to vector<16x1xf32>
    %5 = arith.maximumf %3, %4 : vector<16x1xf32>
    %6 = math.rsqrt %5 : vector<16x1xf32>
    %cst_2 = arith.constant 3.1622777 : f32
    %7 = vector.broadcast %cst_2 : f32 to vector<16x1xf32>
    %8 = arith.mulf %6, %7 : vector<16x1xf32>
    %9 = vector.broadcast %8 : vector<16x1xf32> to vector<16x128xf32>
    %10 = arith.mulf %0, %9 : vector<16x128xf32>
    %11 = arith.truncf %10 : vector<16x128xf32> to vector<16x128xbf16>
    %c0_3 = arith.constant 0 : index
    %c0_4 = arith.constant 0 : index
    %12 = vector.load %arg2[%c0_3, %c0_4] : memref<16x128xbf16, #tpu.memory_space<vmem>>, vector<16x128xbf16>
    tpu.vector_store %arg2[%c0_3, %c0_4], %11 {strides = array<i32>} : memref<16x128xbf16, #tpu.memory_space<vmem>>, vector<16x128xbf16>,
    return
  }
  func.func @transform_0(%arg0: i32) -> (i32, i32) {
    %c0_i32 = arith.constant 0 : i32
    %c0_i32_0 = arith.constant 0 : i32
    return %arg0, %c0_i32 : i32, i32
  }
  func.func @transform_1(%arg0: i32) -> (i32, i32) {
    %c0_i32 = arith.constant 0 : i32
    %c0_i32_0 = arith.constant 0 : i32
    return %arg0, %c0_i32 : i32, i32
  }
}

</mosaic_0001>

<llo_original>
// kernel: tpu_custom_call.1
$region0: #{tpu_custom_call.1}
  #allocation0 [shape = 'u32[]', space=smem, size = 0x4, offset = 0x4, fixed_abs, tag = 'smem constant byte address 0x4 - core index']
  #allocation1 [shape = 'u32[144,128]{1,0:T(1,128)}', space=vmem, size = 0x12000, scoped, tag = 'internal scratch']
  %s0 = inlined_call_operand.hbm [shape: f32[16,128], index: 0, kind: input, shape index: {}]
  %s1 = inlined_call_operand.hbm [shape: bf16[16,128], index: 1, kind: output, shape index: {}]
  %s2 = sld [smem:[#allocation0]]
  $region18: #{tpu_custom_call.1} parent=0
    _
  %s4 = ssub.s32 1, %s2
  %s5 = scalar_select 0, %s4, %s2
  $region1: #{tpu_custom_call.1} parent=0
    #allocation2 [shape = 'u8[8192]{0}', space=vmem, size = 0x2000, scoped, tag = 'input window, operand 0, single buffered']
    #allocation3 [shape = 's32[1]{0}', space=sflag, size = 0x4, scoped, tag = 'scoped memory for tpu_custom_call.1']
    #allocation4 [shape = 's32[1]{0}', space=sflag, size = 0x4, scoped, tag = 'scoped memory for tpu_custom_call.1']
    #allocation5 [shape = 'u8[4096]{0}', space=vmem, size = 0x1000, scoped, tag = 'output window, operand 0, single buffered']
    %6 = vsyncpa [#allocation3], 0
    %7 = vsyncpa [#allocation4], 0
    // Predicated region
    $region2: #{tpu_custom_call.1} parent=1 // pred_check
      _
    $region3: #{tpu_custom_call.1} parent=1 // pred_check_branch
      %9 = sbr.rel (0) target = $region5
    $region4: #{tpu_custom_call.1} parent=1 // pred_region
      %s11 = ssub.s32 256, 256
      %12 = vsyncadd [#allocation3], %s11
      %s13 = sshll.u32 [#allocation2], 4
      %s14 = int_to_ptr.vmem [resolvable:$true] %s13
      %19 = dma.hbm_to_vmem [thread:$0]  %s0, 256, %s14, [#allocation3], 128, 128, 8
    $region5: #{tpu_custom_call.1} parent=1 // pred_fallthru
      _
    // Predicated region
    $region6: #{tpu_custom_call.1} parent=1 // pred_check
      _
    $region7: #{tpu_custom_call.1} parent=1 // pred_check_branch
      %21 = sbr.rel (0) target = $region9
    $region8: #{tpu_custom_call.1} parent=1 // pred_region
      %22 = dma.done [#allocation3], 256
    $region9: #{tpu_custom_call.1} parent=1 // pred_fallthru
      _
    %v23 = vld [vmem:[#allocation2] sm:$0xff]
    %v24 = vld [vmem:[#allocation2 + $0x8] sm:$0xff]
    %v25 = vmul.f32 %v23, %v23
    %v26 = vmul.f32 %v24, %v24
    %27 = vadd.xlane.f32.xlu0 %v25
    %v28 = vpop.xlane.xlu0 %27
    %29 = vadd.xlane.f32.xlu0 %v26
    %v30 = vpop.xlane.xlu0 %29
    %v31 = vmax.f32 %v28, 1e-24
    %v32 = vmax.f32 %v30, 1e-24
    %v33 = vrsqrt.pop %v31
    %v34 = vrsqrt.pop %v32
    %v35 = vmul.f32 %v33, 3.1622777
    %v36 = vmul.f32 %v34, 3.1622777
    %v37 = vmul.f32 %v23, %v35
    %v38 = vmul.f32 %v24, %v36
    %v39 = vpack.c.bf16 %v38, %v37
    %v41 = vunpack.c.l.b16 %v39
    %v42 = vunpack.c.h.b16 %v39
    %v43 = vpack.c.b16 %v41, %v41
    %v44 = vpack.c.b16 %v42, %v42
    %47 = vst [vmem:[#allocation5] sm:$0xf] %v43
    %48 = vst [vmem:[#allocation5 + $0x4] sm:$0xf] %v44
    // Predicated region
    $region10: #{tpu_custom_call.1} parent=1 // pred_check
      _
    $region11: #{tpu_custom_call.1} parent=1 // pred_check_branch
      %50 = sbr.rel (0) target = $region13
    $region12: #{tpu_custom_call.1} parent=1 // pred_region
      %s52 = ssub.s32 128, 128
      %53 = vsyncadd [#allocation4], %s52
      %s54 = sshll.u32 [#allocation5], 4
      %s55 = int_to_ptr.vmem [resolvable:$true] %s54
      %60 = dma.vmem_to_hbm [thread:$0]  %s55, 128, %s1, [#allocation4], 64, 64, 4
    $region13: #{tpu_custom_call.1} parent=1 // pred_fallthru
      _
    // Predicated region
    $region14: #{tpu_custom_call.1} parent=1 // pred_check
      _
    $region15: #{tpu_custom_call.1} parent=1 // pred_check_branch
      %62 = sbr.rel (0) target = $region17
    $region16: #{tpu_custom_call.1} parent=1 // pred_region
      %63 = dma.done [#allocation4], 128
    $region17: #{tpu_custom_call.1} parent=1 // pred_fallthru
      _
    %64 = vsyncpa [#allocation3], 1
    %65 = vsyncpa [#allocation4], 1

</llo_original>
